<compile_context>
chip_gen: v6e
topology: v6e:2x2x1
jax: 0.10.0
libtpu: 0.0.40
codegen_flags: <defaults>
</compile_context>

<pallas_src>
import functools

import jax
import jax.numpy as jnp
from jax.experimental import pallas as pl
from jax.experimental.pallas import tpu as pltpu

NUM_EXPERTS = 16
TOP_K = 4
KH = KW = 3  # kernel_size=3, stride=1, padding='same'


def _round_up(x, m):
    return (x + m - 1) // m * m


# ----------------------------------------------------------------------------
# Pallas kernel: 3x3 'same' conv as ONE fused K=9*Cin GEMM + bias + gate scale
# ----------------------------------------------------------------------------
def conv_combine_kernel(scale_ref, xflat_ref, mask_ref, w_ref, bias_ref,
                        out_ref, xcol_ref, *, height, width, s_pad, cin,
                        tcout, w_resident, rebuild_every_step):
    """Per grid step (b, j):

      scale_ref: (B,) f32 in SMEM                  per-sample sum of selected gates
      xflat_ref: (1, Cin, S_pad + 2*(W+1))         flat spatial, zero-padded stream
      mask_ref:  (9, S_pad) x_dtype                per-tap border-validity mask (0/1)
      w_ref:     (Cout_pad, 9*Cin) or (tcout, 9*Cin)   weights, tap-major / cin-minor
      bias_ref:  (Cout_pad, 1) or (tcout, 1) f32
      out_ref:   (1, tcout, S_pad)                 spatial on lanes (unmasked stores)
      xcol_ref:  (9*Cin, S_pad) x_dtype VMEM scratch   in-kernel im2col
    """
    pad = width + 1

    def build_xcol():
        pieces = []
        t = 0
        for dh in (-1, 0, 1):
            for dw in (-1, 0, 1):
                start = pad + dh * width + dw                      # static, >= 0
                piece = xflat_ref[0, :, start:start + s_pad]       # (Cin, S_pad)
                if not (dh == 0 and dw == 0):                      # center mask == 1
                    piece = piece * mask_ref[t:t + 1, :]
                pieces.append(piece)
                t += 1
        # one full-ref store in the activation dtype (no f32 staging / recast)
        xcol_ref[...] = jnp.concatenate(pieces, axis=0)            # (9*Cin, S_pad)

    if rebuild_every_step:
        build_xcol()                              # Cout-axis parallel (B==1) path
    else:
        pl.when(pl.program_id(1) == 0)(build_xcol)  # build once per sample

    if w_resident:
        j = pl.program_id(1)
        row0 = pl.multiple_of(j * tcout, tcout)
        w_blk = w_ref[pl.ds(row0, tcout), :]                       # (tcout, 9*Cin)
        b_blk = bias_ref[pl.ds(row0, tcout), :]                    # (tcout, 1)
    else:
        w_blk = w_ref[...]
        b_blk = bias_ref[...]

    # Single MXU GEMM with K = 9*Cin, operands in x_dtype, f32 accumulate.
    acc = jnp.dot(w_blk, xcol_ref[...], preferred_element_type=jnp.float32)

    scale = scale_ref[pl.program_id(0)]                            # SMEM scalar
    out_ref[0] = ((acc + b_blk) * scale).astype(out_ref.dtype)


# ----------------------------------------------------------------------------
# Wrapper (glue: gating, layout, tiling decisions)
# ----------------------------------------------------------------------------
def _choose_cout_tiling(cout, cap=256):
    """Return (tcout, cout_padded). Full block if small, else MXU-aligned tiles."""
    if cout <= cap:
        return cout, cout                      # single full block, no constraints
    for t in (256, 128):                       # 256 fills v6e/v7x MXU, 128 fills v5e
        if cout % t == 0:
            return t, cout
    return 128, _round_up(cout, 128)           # pad with dummy output channels


def _vmem_cap_bytes():
    """Generation-aware ceiling for vmem_limit_bytes."""
    try:
        phys = int(pltpu.get_tpu_info().vmem_capacity_bytes)
    except Exception:
        phys = 128 << 20
    return (48 << 20) if phys <= (64 << 20) else (100 << 20)


def moe_kan_conv_forward(x_nchw, params, *, loss_coef=0.01,
                         x_dtype=jnp.bfloat16, out_dtype=None):
    if out_dtype is None:
        out_dtype = x_dtype

    w_gate = params["w_gate"].astype(jnp.float32)   # (Cin, E)
    conv_w = params["conv_w"].astype(jnp.float32)   # (Cout, Cin, KH, KW), OIHW
    conv_b = params["conv_b"].astype(jnp.float32)   # (Cout,)

    B, Cin, H, W = x_nchw.shape
    Cout = conv_w.shape[0]
    E = w_gate.shape[1]
    S = H * W
    S_pad = _round_up(S, 128)            # lane-dense unmasked stores
    PAD = W + 1
    SP = S_pad + 2 * PAD

    x = x_nchw.astype(jnp.float32)

    # --- gating: tiny (B,Cin)@(Cin,E)+softmax; XLA fuses it with the mean ---
    gate_x = jnp.mean(x, axis=(2, 3))                               # AdaptiveAvgPool
    probs = jax.nn.softmax(gate_x @ w_gate, axis=1)

    kk = min(TOP_K + 1, E)
    top_logits, top_indices = jax.lax.top_k(probs, kk)
    top_k_logits = top_logits[:, :TOP_K]
    top_k_indices = top_indices[:, :TOP_K]
    top_k_gates = top_k_logits / (jnp.sum(top_k_logits, axis=1, keepdims=True) + 1e-6)
    gates = jnp.zeros((B, E), jnp.float32).at[
        jnp.arange(B)[:, None], top_k_indices].set(top_k_gates)

    load = jnp.sum((gates > 0).astype(jnp.float32), axis=0)         # _gates_to_load
    importance = jnp.sum(gates, axis=0)

    def cv_squared(v):
        v = v.astype(jnp.float32)
        if v.shape[0] == 1:
            return jnp.float32(0.0)
        return jnp.var(v, ddof=1) / (jnp.mean(v) ** 2 + 1e-10)      # torch.var unbiased

    loss = (cv_squared(importance) + cv_squared(load)) * loss_coef

    # Identical experts -> dispatch/combine collapses to one conv scaled per sample.
    scale = jnp.sum(gates, axis=1)                                  # (B,) -> SMEM

    # --- flat spatial stream, padded to S_pad and by (W+1) zeros on both ends ---
    x_flat = x.reshape(B, Cin, S)
    xflat = jnp.pad(x_flat, ((0, 0), (0, 0),
                             (PAD, PAD + (S_pad - S)))).astype(x_dtype)   # (B,Cin,SP)

    # per-tap validity mask (0/1, exact in bf16); padded positions masked too
    ii = jnp.arange(H).reshape(H, 1)
    jj = jnp.arange(W).reshape(1, W)
    masks = []
    for dh in (-1, 0, 1):
        for dw in (-1, 0, 1):
            m = ((ii + dh >= 0) & (ii + dh < H) & (jj + dw >= 0) & (jj + dw < W))
            masks.append(m.reshape(S))
    tap_mask = jnp.stack(masks, 0).astype(jnp.float32)
    tap_mask = jnp.pad(tap_mask, ((0, 0), (0, S_pad - S))).astype(x_dtype)  # (9,S_pad)

    tcout, Cout_pad = _choose_cout_tiling(Cout)
    n_j = Cout_pad // tcout
    kdim = KH * KW * Cin

    # weights in GEMM orientation (Cout_pad, 9*Cin), tap-major / cin-minor
    w2 = jnp.transpose(conv_w, (0, 2, 3, 1)).reshape(Cout, kdim)
    w2 = jnp.pad(w2, ((0, Cout_pad - Cout), (0, 0))).astype(x_dtype)
    bias2 = jnp.pad(conv_b, (0, Cout_pad - Cout)).reshape(Cout_pad, 1)

    act_b = jnp.dtype(x_dtype).itemsize
    out_b = jnp.dtype(out_dtype).itemsize
    w_bytes = Cout_pad * kdim * act_b
    w_resident = w_bytes <= (4 << 20)     # keep all weights VMEM-resident when small

    if w_resident:
        w_spec = pl.BlockSpec((Cout_pad, kdim), lambda b, j: (0, 0))   # no re-stream
        b_spec = pl.BlockSpec((Cout_pad, 1), lambda b, j: (0, 0))
    else:
        w_spec = pl.BlockSpec((tcout, kdim), lambda b, j: (j, 0))
        b_spec = pl.BlockSpec((tcout, 1), lambda b, j: (j, 0))

    # VMEM budget from the actual block/scratch bytes (+headroom), per-gen cap.
    est = (2 * Cin * SP * act_b                                    # xflat (dbl-buffered)
           + 2 * 9 * S_pad * act_b                                 # tap mask
           + (w_bytes if w_resident else 2 * tcout * kdim * act_b) # weights
           + 2 * Cout_pad * 4                                      # bias
           + 2 * tcout * S_pad * out_b                             # output (dbl-buffered)
           + kdim * S_pad * act_b)                                 # im2col scratch
    vmem_limit = int(min(_vmem_cap_bytes(),
                         max(32 << 20, int(1.25 * est) + (4 << 20))))

    # B==1 (small-batch inference): let megacore split the Cout-tile axis instead of
    # the batch axis; that requires rebuilding the im2col on every step.
    rebuild_every_step = (B == 1 and n_j > 1)
    dim_sem = (("arbitrary", "parallel") if rebuild_every_step
               else ("parallel", "arbitrary"))

    kern = functools.partial(
        conv_combine_kernel, height=H, width=W, s_pad=S_pad, cin=Cin,
        tcout=tcout, w_resident=w_resident, rebuild_every_step=rebuild_every_step)

    y_flat = pl.pallas_call(
        kern,
        out_shape=jax.ShapeDtypeStruct((B, Cout_pad, S_pad), out_dtype),
        grid=(B, n_j),
        in_specs=[
            pl.BlockSpec(memory_space=pltpu.MemorySpace.SMEM),            # scale (B,)
            pl.BlockSpec((1, Cin, SP), lambda b, j: (b, 0, 0)),           # xflat
            pl.BlockSpec((KH * KW, S_pad), lambda b, j: (0, 0)),          # tap mask
            w_spec,                                                       # weights
            b_spec,                                                       # bias
        ],
        out_specs=pl.BlockSpec((1, tcout, S_pad), lambda b, j: (b, j, 0)),
        scratch_shapes=[pltpu.VMEM((kdim, S_pad), x_dtype)],              # im2col
        compiler_params=pltpu.CompilerParams(
            dimension_semantics=dim_sem,
            vmem_limit_bytes=vmem_limit),
    )(scale, xflat, tap_mask, w2, bias2)

    y = y_flat[:, :Cout, :S].reshape(B, Cout, H, W)   # trim Cout/S padding, NCHW
    return y, loss


# ----------------------------------------------------------------------------
# Pure-JAX reference (same math, no Pallas) for verification
# ----------------------------------------------------------------------------
def reference_forward(x_nchw, params, *, loss_coef=0.01):
    w_gate, conv_w, conv_b = params["w_gate"], params["conv_w"], params["conv_b"]
    B, Cin, H, W = x_nchw.shape
    x = x_nchw.astype(jnp.float32)

    gate_x = jnp.mean(x, axis=(2, 3))
    probs = jax.nn.softmax(gate_x @ w_gate, axis=1)
    kk = min(TOP_K + 1, probs.shape[1])
    top_logits, top_indices = jax.lax.top_k(probs, kk)
    top_k_logits = top_logits[:, :TOP_K]
    top_k_indices = top_indices[:, :TOP_K]
    top_k_gates = top_k_logits / (jnp.sum(top_k_logits, axis=1, keepdims=True) + 1e-6)
    gates = jnp.zeros_like(probs).at[
        jnp.arange(B)[:, None], top_k_indices].set(top_k_gates)
    load = jnp.sum((gates > 0).astype(jnp.float32), axis=0)
    importance = jnp.sum(gates, axis=0)

    def cv_squared(v):
        return jnp.var(v, ddof=1) / (jnp.mean(v) ** 2 + 1e-10)

    loss = (cv_squared(importance) + cv_squared(load)) * loss_coef

    y_conv = jax.lax.conv_general_dilated(
        x, conv_w.astype(jnp.float32), window_strides=(1, 1), padding="SAME",
        dimension_numbers=("NCHW", "OIHW", "NCHW"),
    ) + conv_b.reshape(1, -1, 1, 1)
    y = y_conv * jnp.sum(gates, axis=1).reshape(B, 1, 1, 1)
    return y, loss


if __name__ == "__main__":
    key = jax.random.PRNGKey(0)
    k1, k2, k3, k4, k5, k6, k7, k8 = jax.random.split(key, 8)

    # ---- case 1: B=2, Cin=4, Cout=8, 16x16 (batch-parallel path, S 128-aligned) ----
    B, Cin, Cout, H, W = 2, 4, 8, 16, 16
    x = jax.random.normal(k1, (B, Cin, H, W), jnp.float32)
    params = {
        # PyTorch init is zeros (degenerate gating); small random values used instead
        # so the gating path is exercised. w_noise exists in the module but is unused
        # on the train=False path.
        "w_gate": 0.1 * jax.random.normal(k2, (Cin, NUM_EXPERTS), jnp.float32),
        "w_noise": jnp.zeros((Cin, NUM_EXPERTS), jnp.float32),
        "conv_w": 0.1 * jax.random.normal(k3, (Cout, Cin, KH, KW), jnp.float32),
        "conv_b": 0.1 * jax.random.normal(k4, (Cout,), jnp.float32),
    }
    y_ref, loss_ref = reference_forward(x, params)

    # Exact-precision path (f32 stream + f32 out): tight check of kernel logic.
    y32, loss32 = moe_kan_conv_forward(x, params, x_dtype=jnp.float32)
    jax.block_until_ready((y32, loss32))
    assert y32.shape == (B, Cout, H, W)
    assert jnp.allclose(y32, y_ref, atol=1e-4, rtol=1e-4)
    assert jnp.allclose(loss32, loss_ref, atol=1e-5, rtol=1e-4)

    # Default fast path (bf16 stream/weights/scratch/output, f32 acc + epilogue).
    y16, loss16 = moe_kan_conv_forward(x, params)
    jax.block_until_ready((y16, loss16))
    assert y16.dtype == jnp.bfloat16
    assert jnp.allclose(y16.astype(jnp.float32), y_ref, atol=5e-2, rtol=5e-2)
    assert jnp.allclose(loss16, loss_ref, atol=1e-5, rtol=1e-4)

    # ---- case 2: B=1, Cin=4, Cout=320, 14x14 (S & Cout padding, Cout tiling,
    #      Cout-parallel megacore path with per-step im2col rebuild) ----
    B2, Cin2, Cout2, H2, W2 = 1, 4, 320, 14, 14
    x2 = jax.random.normal(k5, (B2, Cin2, H2, W2), jnp.float32)
    params2 = {
        "w_gate": 0.1 * jax.random.normal(k6, (Cin2, NUM_EXPERTS), jnp.float32),
        "w_noise": jnp.zeros((Cin2, NUM_EXPERTS), jnp.float32),
        "conv_w": 0.1 * jax.random.normal(k7, (Cout2, Cin2, KH, KW), jnp.float32),
        "conv_b": 0.1 * jax.random.normal(k8, (Cout2,), jnp.float32),
    }
    y2_ref, loss2_ref = reference_forward(x2, params2)

    y2, loss2 = moe_kan_conv_forward(x2, params2, x_dtype=jnp.float32)
    jax.block_until_ready((y2, loss2))
    assert y2.shape == (B2, Cout2, H2, W2)
    assert jnp.allclose(y2, y2_ref, atol=1e-4, rtol=1e-4)
    assert jnp.allclose(loss2, loss2_ref, atol=1e-5, rtol=1e-4)

    y2b, _ = moe_kan_conv_forward(x2, params2)   # bf16 fast path at this config too
    jax.block_until_ready(y2b)
    assert jnp.allclose(y2b.astype(jnp.float32), y2_ref, atol=5e-2, rtol=5e-2)

    print("KERNEL_OK")
</pallas_src>

<mosaic_0001>
module attributes {stable_mosaic.version = 11 : i64} {
  func.func @conv_combine_kernel(%arg0: i32, %arg1: i32, %arg2: memref<2xf32, #tpu.memory_space<smem>>, %arg3: memref<1x4x290xf32, #tpu.memory_space<vmem>>, %arg4: memref<9x256xf32, #tpu.memory_space<vmem>>, %arg5: memref<8x36xf32, #tpu.memory_space<vmem>>, %arg6: memref<8x1xf32, #tpu.memory_space<vmem>>, %arg7: memref<1x8x256xf32, #tpu.memory_space<vmem>>, %arg8: memref<36x256xf32, #tpu.memory_space<vmem>>) attributes {dimension_semantics = [#tpu.dimension_semantics<parallel>, #tpu.dimension_semantics<arbitrary>], iteration_bounds = array<i64: 2, 1>, scalar_prefetch = 0 : i64, scratch_operands = 1 : i64, tpu.core_type = #tpu.core_type<tc>, window_params = [{transform_indices = @transform_0, window_bounds = array<i64: 2>}, {transform_indices = @transform_1, window_bounds = array<i64: 1, 4, 290>}, {pipeline_mode = #tpu.pipeline_mode<synchronous>, transform_indices = @transform_2, window_bounds = array<i64: 9, 256>}, {pipeline_mode = #tpu.pipeline_mode<synchronous>, transform_indices = @transform_3, window_bounds = array<i64: 8, 36>}, {pipeline_mode = #tpu.pipeline_mode<synchronous>, transform_indices = @transform_4, window_bounds = array<i64: 8, 1>}, {transform_indices = @transform_5, window_bounds = array<i64: 1, 8, 256>}]} {
    %c0_i32 = arith.constant 0 : i32
    %0 = arith.cmpi eq, %arg1, %c0_i32 : i32
    %1 = arith.extui %0 : i1 to i32
    %c0_i32_0 = arith.constant 0 : i32
    %2 = arith.cmpi ne, %1, %c0_i32_0 : i32
    scf.if %2 {
      %c0_7 = arith.constant 0 : index
      %c0_8 = arith.constant 0 : index
      %c0_9 = arith.constant 0 : index
      %20 = vector.load %arg3[%c0_7, %c0_8, %c0_9] : memref<1x4x290xf32, #tpu.memory_space<vmem>>, vector<1x4x256xf32>
      %21 = vector.shape_cast %20 : vector<1x4x256xf32> to vector<4x256xf32>
      %c0_10 = arith.constant 0 : index
      %c0_11 = arith.constant 0 : index
      %22 = vector.load %arg4[%c0_10, %c0_11] : memref<9x256xf32, #tpu.memory_space<vmem>>, vector<1x256xf32>
      %23 = vector.broadcast %22 : vector<1x256xf32> to vector<4x256xf32>
      %24 = arith.mulf %21, %23 : vector<4x256xf32>
      %c0_12 = arith.constant 0 : index
      %c0_13 = arith.constant 0 : index
      %c1 = arith.constant 1 : index
      %25 = vector.load %arg3[%c0_12, %c0_13, %c1] : memref<1x4x290xf32, #tpu.memory_space<vmem>>, vector<1x4x256xf32>
      %26 = vector.shape_cast %25 : vector<1x4x256xf32> to vector<4x256xf32>
      %c1_14 = arith.constant 1 : index
      %c0_15 = arith.constant 0 : index
      %27 = vector.load %arg4[%c1_14, %c0_15] : memref<9x256xf32, #tpu.memory_space<vmem>>, vector<1x256xf32>
      %28 = vector.broadcast %27 : vector<1x256xf32> to vector<4x256xf32>
      %29 = arith.mulf %26, %28 : vector<4x256xf32>
      %c0_16 = arith.constant 0 : index
      %c0_17 = arith.constant 0 : index
      %c2 = arith.constant 2 : index
      %30 = vector.load %arg3[%c0_16, %c0_17, %c2] : memref<1x4x290xf32, #tpu.memory_space<vmem>>, vector<1x4x256xf32>
      %31 = vector.shape_cast %30 : vector<1x4x256xf32> to vector<4x256xf32>
      %c2_18 = arith.constant 2 : index
      %c0_19 = arith.constant 0 : index
      %32 = vector.load %arg4[%c2_18, %c0_19] : memref<9x256xf32, #tpu.memory_space<vmem>>, vector<1x256xf32>
      %33 = vector.broadcast %32 : vector<1x256xf32> to vector<4x256xf32>
      %34 = arith.mulf %31, %33 : vector<4x256xf32>
      %c0_20 = arith.constant 0 : index
      %c0_21 = arith.constant 0 : index
      %c16 = arith.constant 16 : index
      %35 = vector.load %arg3[%c0_20, %c0_21, %c16] : memref<1x4x290xf32, #tpu.memory_space<vmem>>, vector<1x4x256xf32>
      %36 = vector.shape_cast %35 : vector<1x4x256xf32> to vector<4x256xf32>
      %c3 = arith.constant 3 : index
      %c0_22 = arith.constant 0 : index
      %37 = vector.load %arg4[%c3, %c0_22] : memref<9x256xf32, #tpu.memory_space<vmem>>, vector<1x256xf32>
      %38 = vector.broadcast %37 : vector<1x256xf32> to vector<4x256xf32>
      %39 = arith.mulf %36, %38 : vector<4x256xf32>
      %c0_23 = arith.constant 0 : index
      %c0_24 = arith.constant 0 : index
      %c17 = arith.constant 17 : index
      %40 = vector.load %arg3[%c0_23, %c0_24, %c17] : memref<1x4x290xf32, #tpu.memory_space<vmem>>, vector<1x4x256xf32>
      %41 = vector.shape_cast %40 : vector<1x4x256xf32> to vector<4x256xf32>
      %c0_25 = arith.constant 0 : index
      %c0_26 = arith.constant 0 : index
      %c18 = arith.constant 18 : index
      %42 = vector.load %arg3[%c0_25, %c0_26, %c18] : memref<1x4x290xf32, #tpu.memory_space<vmem>>, vector<1x4x256xf32>
      %43 = vector.shape_cast %42 : vector<1x4x256xf32> to vector<4x256xf32>
      %c5 = arith.constant 5 : index
      %c0_27 = arith.constant 0 : index
      %44 = vector.load %arg4[%c5, %c0_27] : memref<9x256xf32, #tpu.memory_space<vmem>>, vector<1x256xf32>
      %45 = vector.broadcast %44 : vector<1x256xf32> to vector<4x256xf32>
      %46 = arith.mulf %43, %45 : vector<4x256xf32>
      %c0_28 = arith.constant 0 : index
      %c0_29 = arith.constant 0 : index
      %c32 = arith.constant 32 : index
      %47 = vector.load %arg3[%c0_28, %c0_29, %c32] : memref<1x4x290xf32, #tpu.memory_space<vmem>>, vector<1x4x256xf32>
      %48 = vector.shape_cast %47 : vector<1x4x256xf32> to vector<4x256xf32>
      %c6 = arith.constant 6 : index
      %c0_30 = arith.constant 0 : index
      %49 = vector.load %arg4[%c6, %c0_30] : memref<9x256xf32, #tpu.memory_space<vmem>>, vector<1x256xf32>
      %50 = vector.broadcast %49 : vector<1x256xf32> to vector<4x256xf32>
      %51 = arith.mulf %48, %50 : vector<4x256xf32>
      %c0_31 = arith.constant 0 : index
      %c0_32 = arith.constant 0 : index
      %c33 = arith.constant 33 : index
      %52 = vector.load %arg3[%c0_31, %c0_32, %c33] : memref<1x4x290xf32, #tpu.memory_space<vmem>>, vector<1x4x256xf32>
      %53 = vector.shape_cast %52 : vector<1x4x256xf32> to vector<4x256xf32>
      %c7 = arith.constant 7 : index
      %c0_33 = arith.constant 0 : index
      %54 = vector.load %arg4[%c7, %c0_33] : memref<9x256xf32, #tpu.memory_space<vmem>>, vector<1x256xf32>
      %55 = vector.broadcast %54 : vector<1x256xf32> to vector<4x256xf32>
      %56 = arith.mulf %53, %55 : vector<4x256xf32>
      %c0_34 = arith.constant 0 : index
      %c0_35 = arith.constant 0 : index
      %c34 = arith.constant 34 : index
      %57 = vector.load %arg3[%c0_34, %c0_35, %c34] : memref<1x4x290xf32, #tpu.memory_space<vmem>>, vector<1x4x256xf32>
      %58 = vector.shape_cast %57 : vector<1x4x256xf32> to vector<4x256xf32>
      %c8 = arith.constant 8 : index
      %c0_36 = arith.constant 0 : index
      %59 = vector.load %arg4[%c8, %c0_36] : memref<9x256xf32, #tpu.memory_space<vmem>>, vector<1x256xf32>
      %60 = vector.broadcast %59 : vector<1x256xf32> to vector<4x256xf32>
      %61 = arith.mulf %58, %60 : vector<4x256xf32>
      %62 = tpu.concatenate %24, %29, %34, %39, %41, %46, %51, %56, %61 in 0 : vector<4x256xf32>, vector<4x256xf32>, vector<4x256xf32>, vector<4x256xf32>, vector<4x256xf32>, vector<4x256xf32>, vector<4x256xf32>, vector<4x256xf32>, vector<4x256xf32> -> vector<36x256xf32>
      %c0_37 = arith.constant 0 : index
      %c0_38 = arith.constant 0 : index
      %63 = vector.load %arg8[%c0_37, %c0_38] : memref<36x256xf32, #tpu.memory_space<vmem>>, vector<36x256xf32>
      tpu.vector_store %arg8[%c0_37, %c0_38], %62 {strides = array<i32>} : memref<36x256xf32, #tpu.memory_space<vmem>>, vector<36x256xf32>,
    } else {
    }
    %c8_i32 = arith.constant 8 : i32
    %3 = arith.muli %arg1, %c8_i32 : i32
    %4 = tpu.assume_multiple %3, 8 : i32
    %5 = arith.index_cast %4 : i32 to index
    %c0 = arith.constant 0 : index
    %6 = vector.load %arg5[%5, %c0] : memref<8x36xf32, #tpu.memory_space<vmem>>, vector<8x36xf32>
    %7 = arith.index_cast %4 : i32 to index
    %c0_1 = arith.constant 0 : index
    %8 = vector.load %arg6[%7, %c0_1] : memref<8x1xf32, #tpu.memory_space<vmem>>, vector<8x1xf32>
    %c0_2 = arith.constant 0 : index
    %c0_3 = arith.constant 0 : index
    %9 = vector.load %arg8[%c0_2, %c0_3] : memref<36x256xf32, #tpu.memory_space<vmem>>, vector<36x256xf32>
    %cst = arith.constant dense<0.000000e+00> : vector<8x256xf32>
    %10 = tpu.matmul %6, %9, %cst {dimension_numbers = #tpu.dot_dimension_numbers<[1], [0], [0], [1], [0, 0, 1, 1], [], []>} : vector<8x36xf32>, vector<36x256xf32>, vector<8x256xf32> -> vector<8x256xf32>
    %11 = arith.index_cast %arg0 : i32 to index
    %12 = memref.load %arg2[%11] : memref<2xf32, #tpu.memory_space<smem>>
    %13 = vector.broadcast %8 : vector<8x1xf32> to vector<8x256xf32>
    %14 = arith.addf %10, %13 : vector<8x256xf32>
    %15 = vector.broadcast %12 : f32 to vector<8x256xf32>
    %16 = arith.mulf %14, %15 : vector<8x256xf32>
    %c0_4 = arith.constant 0 : index
    %c0_5 = arith.constant 0 : index
    %c0_6 = arith.constant 0 : index
    %17 = vector.load %arg7[%c0_4, %c0_5, %c0_6] : memref<1x8x256xf32, #tpu.memory_space<vmem>>, vector<1x8x256xf32>
    %18 = vector.shape_cast %17 : vector<1x8x256xf32> to vector<8x256xf32>
    %19 = vector.shape_cast %16 : vector<8x256xf32> to vector<1x8x256xf32>
    tpu.vector_store %arg7[%c0_4, %c0_5, %c0_6], %19 {strides = array<i32>} : memref<1x8x256xf32, #tpu.memory_space<vmem>>, vector<1x8x256xf32>,
    return
  }
  func.func @transform_0(%arg0: i32, %arg1: i32) -> i32 {
    %c0_i32 = arith.constant 0 : i32
    %c0_i32_0 = arith.constant 0 : i32
    return %c0_i32 : i32
  }
  func.func @transform_1(%arg0: i32, %arg1: i32) -> (i32, i32, i32) {
    %c0_i32 = arith.constant 0 : i32
    %c0_i32_0 = arith.constant 0 : i32
    %c0_i32_1 = arith.constant 0 : i32
    return %arg0, %c0_i32, %c0_i32_0 : i32, i32, i32
  }
  func.func @transform_2(%arg0: i32, %arg1: i32) -> (i32, i32) {
    %c0_i32 = arith.constant 0 : i32
    %c0_i32_0 = arith.constant 0 : i32
    %c0_i32_1 = arith.constant 0 : i32
    return %c0_i32, %c0_i32_0 : i32, i32
  }
  func.func @transform_3(%arg0: i32, %arg1: i32) -> (i32, i32) {
    %c0_i32 = arith.constant 0 : i32
    %c0_i32_0 = arith.constant 0 : i32
    %c0_i32_1 = arith.constant 0 : i32
    return %c0_i32, %c0_i32_0 : i32, i32
  }
  func.func @transform_4(%arg0: i32, %arg1: i32) -> (i32, i32) {
    %c0_i32 = arith.constant 0 : i32
    %c0_i32_0 = arith.constant 0 : i32
    %c0_i32_1 = arith.constant 0 : i32
    return %c0_i32, %c0_i32_0 : i32, i32
  }
  func.func @transform_5(%arg0: i32, %arg1: i32) -> (i32, i32, i32) {
    %c0_i32 = arith.constant 0 : i32
    %c0_i32_0 = arith.constant 0 : i32
    return %arg0, %arg1, %c0_i32 : i32, i32, i32
  }
}

</mosaic_0001>

<llo_original>
// kernel: tpu_custom_call.1
$region0: #{tpu_custom_call.1}
  #allocation0 [shape = 'u32[]', space=smem, size = 0x4, offset = 0x4, fixed_abs, tag = 'smem constant byte address 0x4 - core index']
  #allocation1 [shape = 'u32[144,128]{1,0:T(1,128)}', space=vmem, size = 0x12000, scoped, tag = 'internal scratch']
  #allocation2 [shape = 'f32[36,256]{1,0:T(8,128)}', space=vmem, size = 0xa000, scoped, tag = 'scratch operand']
  %s0 = inlined_call_operand.vmem [shape: f32[2], index: 0, kind: input, shape index: {}]
  %s1 = inlined_call_operand.hbm [shape: f32[2,4,290], index: 1, kind: input, shape index: {}]
  %s2 = inlined_call_operand.hbm [shape: f32[9,256], index: 2, kind: input, shape index: {}]
  %s3 = inlined_call_operand.vmem [shape: f32[8,36], index: 3, kind: input, shape index: {}]
  %s4 = inlined_call_operand.vmem [shape: f32[8,1], index: 4, kind: input, shape index: {}]
  %s5 = inlined_call_operand.hbm [shape: f32[2,8,256], index: 5, kind: output, shape index: {}]
  %s6 = sld [smem:[#allocation0]]
  $region69: #{tpu_custom_call.1} parent=0
    _
  %s8 = ssub.s32 1, %s6
  %s9 = scalar_select 0, %s8, %s6
  $region1: #{tpu_custom_call.1} parent=0
    #allocation3 [shape = 'u8[512]{0}', space=smem, size = 0x200, scoped, tag = 'input window, operand 0, single buffered']
    #allocation4 [shape = 's32[2]{0}', space=sflag, size = 0x8, scoped, tag = 'scoped memory for tpu_custom_call.1']
    #allocation5 [shape = 's32[2]{0}', space=sflag, size = 0x8, scoped, tag = 'scoped memory for tpu_custom_call.1']
    #allocation6 [shape = 's32[2]{0}', space=sflag, size = 0x8, scoped, tag = 'scoped memory for tpu_custom_call.1']
    #allocation7 [shape = 'u8[12288]{0}', space=vmem, size = 0x3000, scoped, tag = 'input window, operand 1']
    #allocation8 [shape = 'u8[16384]{0}', space=vmem, size = 0x4000, scoped, tag = 'input window, operand 2, single buffered']
    #allocation9 [shape = 's32[1]{0}', space=sflag, size = 0x4, scoped, tag = 'scoped memory for tpu_custom_call.1']
    #allocation10 [shape = 'u8[16384]{0}', space=vmem, size = 0x4000, scoped, tag = 'output window, operand 0']
    %10 = vsyncpa [#allocation6], 0
    %11 = vsyncpa [#allocation4], 0
    %s12 = scalar_lea.sflag [#allocation4], 1
    %13 = vsyncpa %s12, 0
    %14 = vsyncpa [#allocation9], 0
    %15 = vsyncpa [#allocation5], 0
    %s16 = scalar_lea.sflag [#allocation5], 1
    %17 = vsyncpa %s16, 0
    loop: start=0, step=1, limit=4
    $region2: #{tpu_custom_call.1} parent=1 // loop_pre_header
      _
    $region3: #{tpu_custom_call.1} parent=1 // loop_header
      %s19 = sphi 0, %s23
      %p20 = scmp.ge.s32.totalorder %s19, 4
      %s26 = sphi 0, %s38
      %s27 = sphi 0, %s34
      %s28 = sphi 0, %s26
      %s29 = sphi 0, %s27
      %s30 = sphi 0, %s28
      %s31 = sphi 0, %s29
      %s39 = sphi 0, %s39
      %s41 = sphi 0, %s39
      %s42 = sphi 0, %s41
      %s56 = sphi 0, %s42
      %s62 = sphi 0, %s64
      %s65 = sphi 0, %s62
      %s66 = sphi 0, %s65
      %s82 = sphi 0, %s66
      %s86 = sphi 0, %s86
      %s88 = sphi 0, %s86
      %s89 = sphi 0, %s88
      %s103 = sphi 0, %s89
      %s107 = sphi 0, %s107
      %s109 = sphi 0, %s107
      %s110 = sphi 0, %s109
      %s124 = sphi 0, %s110
      %s128 = sphi 0, %s128
      %s130 = sphi 0, %s128
      %s131 = sphi 0, %s130
      %s145 = sphi 0, %s131
      %s153 = sphi 0, %s155
      %s156 = sphi 0, %s153
      %s157 = sphi 0, %s156
      %s173 = sphi 0, %s157
    $region4: #{tpu_custom_call.1} parent=1 // loop_header_branch
      %22 = sbr.rel (%p20) target = $region8
    $region5: #{tpu_custom_call.1} parent=1 // loop_body
      %s24 = ssub.s32 %s19, 1
      %s25 = ssub.s32 %s19, 2
      %s32 = sadd.s32 1, %s27
      %p33 = scmp.ge.s32.totalorder %s32, 1
      %s34 = scalar_select %p33, 0, %s32
      %s35 = sadd.s32 1, %s26
      %s36 = scalar_select %p33, %s35, %s26
      %p37 = scmp.ge.s32.totalorder %s36, 2
      %s38 = scalar_select %p37, 0, %s36
      %s40 = sadd.s32 %s39, 1
      %p43 = scmp.eq.s32.totalorder %s19, 1
      %p44 = scmp.ne.s32.totalorder %s39, %s41
      %p45 = scmp.eq.s32.totalorder %s19, 0
      %p46 = por %p44, %p45
      %p47 = scmp.ne.s32.totalorder %s39, %s41
      %p48 = scmp.eq.s32.totalorder %s24, 1
      %p49 = por %p47, %p48
      %p50 = scmp.ne.s32.totalorder %s41, %s42
      %p51 = scmp.eq.s32.totalorder %s24, 0
      %p52 = por %p50, %p51
      %p53 = scmp.ne.s32.totalorder %s41, %s42
      %p54 = scmp.eq.s32.totalorder %s25, 1
      %p55 = por %p53, %p54
      %p57 = scmp.ne.s32.totalorder %s42, %s56
      %p58 = scmp.eq.s32.totalorder %s25, 0
      %p59 = por %p57, %p58
      %s60 = ssub.s32 %s26, %s38
      %p61 = scmp.eq.s32.totalorder %s60, 0
      %s63 = sadd.s32 %s62, 1
      %s64 = scalar_select %p61, %s62, %s63
      %p67 = pneg %p61
      %p68 = scmp.eq.s32.totalorder %s19, 1
      %p69 = por %p67, %p68
      %p70 = scmp.ne.s32.totalorder %s62, %s65
      %p71 = scmp.eq.s32.totalorder %s19, 0
      %p72 = por %p70, %p71
      %p73 = scmp.ne.s32.totalorder %s62, %s65
      %p74 = scmp.eq.s32.totalorder %s24, 1
      %p75 = por %p73, %p74
      %p76 = scmp.ne.s32.totalorder %s65, %s66
      %p77 = scmp.eq.s32.totalorder %s24, 0
      %p78 = por %p76, %p77
      %p79 = scmp.ne.s32.totalorder %s65, %s66
      %p80 = scmp.eq.s32.totalorder %s25, 1
      %p81 = por %p79, %p80
      %p83 = scmp.ne.s32.totalorder %s66, %s82
      %p84 = scmp.eq.s32.totalorder %s25, 0
      %p85 = por %p83, %p84
      %s87 = sadd.s32 %s86, 1
      %p90 = scmp.eq.s32.totalorder %s19, 1
      %p91 = scmp.ne.s32.totalorder %s86, %s88
      %p92 = scmp.eq.s32.totalorder %s19, 0
      %p93 = por %p91, %p92
      %p94 = scmp.ne.s32.totalorder %s86, %s88
      %p95 = scmp.eq.s32.totalorder %s24, 1
      %p96 = por %p94, %p95
      %p97 = scmp.ne.s32.totalorder %s88, %s89
      %p98 = scmp.eq.s32.totalorder %s24, 0
      %p99 = por %p97, %p98
      %p100 = scmp.ne.s32.totalorder %s88, %s89
      %p101 = scmp.eq.s32.totalorder %s25, 1
      %p102 = por %p100, %p101
      %p104 = scmp.ne.s32.totalorder %s89, %s103
      %p105 = scmp.eq.s32.totalorder %s25, 0
      %p106 = por %p104, %p105
      %s108 = sadd.s32 %s107, 1
      %p111 = scmp.eq.s32.totalorder %s19, 1
      %p112 = scmp.ne.s32.totalorder %s107, %s109
      %p113 = scmp.eq.s32.totalorder %s19, 0
      %p114 = por %p112, %p113
      %p115 = scmp.ne.s32.totalorder %s107, %s109
      %p116 = scmp.eq.s32.totalorder %s24, 1
      %p117 = por %p115, %p116
      %p118 = scmp.ne.s32.totalorder %s109, %s110
      %p119 = scmp.eq.s32.totalorder %s24, 0
      %p120 = por %p118, %p119
      %p121 = scmp.ne.s32.totalorder %s109, %s110
      %p122 = scmp.eq.s32.totalorder %s25, 1
      %p123 = por %p121, %p122
      %p125 = scmp.ne.s32.totalorder %s110, %s124
      %p126 = scmp.eq.s32.totalorder %s25, 0
      %p127 = por %p125, %p126
      %s129 = sadd.s32 %s128, 1
      %p132 = scmp.eq.s32.totalorder %s19, 1
      %p133 = scmp.ne.s32.totalorder %s128, %s130
      %p134 = scmp.eq.s32.totalorder %s19, 0
      %p135 = por %p133, %p134
      %p136 = scmp.ne.s32.totalorder %s128, %s130
      %p137 = scmp.eq.s32.totalorder %s24, 1
      %p138 = por %p136, %p137
      %p139 = scmp.ne.s32.totalorder %s130, %s131
      %p140 = scmp.eq.s32.totalorder %s24, 0
      %p141 = por %p139, %p140
      %p142 = scmp.ne.s32.totalorder %s130, %s131
      %p143 = scmp.eq.s32.totalorder %s25, 1
      %p144 = por %p142, %p143
      %p146 = scmp.ne.s32.totalorder %s131, %s145
      %p147 = scmp.eq.s32.totalorder %s25, 0
      %p148 = por %p146, %p147
      %s149 = ssub.s32 %s26, %s38
      %s150 = ssub.s32 %s27, %s34
      %s151 = sor.u32 %s149, %s150
      %p152 = scmp.eq.s32.totalorder %s151, 0
      %s154 = sadd.s32 %s153, 1
      %s155 = scalar_select %p152, %s153, %s154
      %p158 = pneg %p152
      %p159 = scmp.eq.s32.totalorder %s19, 1
      %p160 = por %p158, %p159
      %p161 = scmp.ne.s32.totalorder %s153, %s156
      %p162 = scmp.eq.s32.totalorder %s19, 0
      %p163 = por %p161, %p162
      %p164 = scmp.ne.s32.totalorder %s153, %s156
      %p165 = scmp.eq.s32.totalorder %s24, 1
      %p166 = por %p164, %p165
      %p167 = scmp.ne.s32.totalorder %s156, %s157
      %p168 = scmp.eq.s32.totalorder %s24, 0
      %p169 = por %p167, %p168
      %p170 = scmp.ne.s32.totalorder %s156, %s157
      %p171 = scmp.eq.s32.totalorder %s25, 1
      %p172 = por %p170, %p171
      %p174 = scmp.ne.s32.totalorder %s157, %s173
      %p175 = scmp.eq.s32.totalorder %s25, 0
      %p176 = por %p174, %p175
      %p177 = scmp.le.s32.totalorder 1, %s19
      %p178 = scmp.lt.s32.totalorder %s19, 3
      %p179 = pnand %p177, %p178
      %p180 = pneg %p179
      // Predicated region
      $region9: #{tpu_custom_call.1} parent=5 // pred_check
        _
      $region10: #{tpu_custom_call.1} parent=5 // pred_check_branch
        %182 = sbr.rel (%p179) target = $region12
      $region11: #{tpu_custom_call.1} parent=5 // pred_region
        %s183 = ssub.s32 %s19, 1
        // Predicated region
        $region13: #{tpu_custom_call.1} parent=11 // pred_check
          %p184 = pneg %p52
        $region14: #{tpu_custom_call.1} parent=11 // pred_check_branch
          %186 = sbr.rel (%p184) target = $region16
        $region15: #{tpu_custom_call.1} parent=11 // pred_region
          %s188 = ssub.s32 16, 16
          %189 = vsyncadd [#allocation6], %s188
          %s191 = sshll.u32 %s0, 4
          %s192 = int_to_ptr.vmem [resolvable:$true] %s191
          %194 = dma.vmem_to_smem %s192, 16, [#allocation3], [#allocation6]
        $region16: #{tpu_custom_call.1} parent=11 // pred_fallthru
          _
        // Predicated region
        $region17: #{tpu_custom_call.1} parent=11 // pred_check
          %p195 = pneg %p99
        $region18: #{tpu_custom_call.1} parent=11 // pred_check_branch
          %197 = sbr.rel (%p195) target = $region20
        $region19: #{tpu_custom_call.1} parent=11 // pred_region
          %s199 = ssub.s32 512, 512
          %200 = vsyncadd [#allocation9], %s199
          %s201 = sshll.u32 [#allocation8], 4
          %s202 = int_to_ptr.vmem [resolvable:$true] %s201
          %207 = dma.hbm_to_vmem [thread:$0]  %s2, 512, %s202, [#allocation9], 256, 256, 16
        $region20: #{tpu_custom_call.1} parent=11 // pred_fallthru
          _
        // Predicated region
        $region21: #{tpu_custom_call.1} parent=11 // pred_check
          %p208 = pneg %p120
        $region22: #{tpu_custom_call.1} parent=11 // pred_check_branch
          %210 = sbr.rel (%p208) target = $region24
        $region23: #{tpu_custom_call.1} parent=11 // pred_region
          _
        $region24: #{tpu_custom_call.1} parent=11 // pred_fallthru
          _
        // Predicated region
        $region25: #{tpu_custom_call.1} parent=11 // pred_check
          %p211 = pneg %p141
        $region26: #{tpu_custom_call.1} parent=11 // pred_check_branch
          %213 = sbr.rel (%p211) target = $region28
        $region27: #{tpu_custom_call.1} parent=11 // pred_region
          _
        $region28: #{tpu_custom_call.1} parent=11 // pred_fallthru
          _
      $region12: #{tpu_custom_call.1} parent=5 // pred_fallthru
        _
      %p214 = scmp.lt.s32.totalorder %s19, 2
      // Predicated region
      $region29: #{tpu_custom_call.1} parent=5 // pred_check
        %p215 = pneg %p214
      $region30: #{tpu_custom_call.1} parent=5 // pred_check_branch
        %217 = sbr.rel (%p215) target = $region32
      $region31: #{tpu_custom_call.1} parent=5 // pred_region
        // Predicated region
        $region33: #{tpu_custom_call.1} parent=31 // pred_check
          %p218 = pneg %p72
        $region34: #{tpu_custom_call.1} parent=31 // pred_check_branch
          %220 = sbr.rel (%p218) target = $region36
        $region35: #{tpu_custom_call.1} parent=31 // pred_region
          %s221 = sand.u32 %s62, 1
          %s222 = scalar_lea.sflag [#allocation4], %s221
          %s223 = sand.u32 %s62, 1
          %s224 = smul.addr %s223, 12
          %s225 = scalar_lea.vmem [#allocation7], %s224
          %s227 = ssub.s32 192, 192
          %228 = vsyncadd %s222, %s227
          %s229 = smul.addr %s26, 3
          %s230 = smul.addr %s229, 64
          %s231 = scalar_lea.hbm %s1, %s230
          %s233 = sshll.u32 %s225, 4
          %s234 = int_to_ptr.vmem [resolvable:$true] %s233
          %236 = dma.hbm_to_vmem [thread:$0]  %s231, 192, %s234, %s222
        $region36: #{tpu_custom_call.1} parent=31 // pred_fallthru
          _
      $region32: #{tpu_custom_call.1} parent=5 // pred_fallthru
        _
      %p237 = scmp.le.s32.totalorder 1, %s19
      %p238 = scmp.lt.s32.totalorder %s19, 3
      %p239 = pnand %p237, %p238
      %p240 = pneg %p239
      // Predicated region
      $region37: #{tpu_custom_call.1} parent=5 // pred_check
        _
      $region38: #{tpu_custom_call.1} parent=5 // pred_check_branch
        %242 = sbr.rel (%p239) target = $region40
      $region39: #{tpu_custom_call.1} parent=5 // pred_region
        %s243 = ssub.s32 %s19, 1
        // Predicated region
        $region41: #{tpu_custom_call.1} parent=39 // pred_check
          %p244 = pneg %p52
        $region42: #{tpu_custom_call.1} parent=39 // pred_check_branch
          %246 = sbr.rel (%p244) target = $region44
        $region43: #{tpu_custom_call.1} parent=39 // pred_region
          %247 = dma.done [#allocation6], 16
        $region44: #{tpu_custom_call.1} parent=39 // pred_fallthru
          _
        %s248 = sand.u32 %s65, 1
        %s249 = scalar_lea.sflag [#allocation4], %s248
        %s250 = sand.u32 %s65, 1
        %s251 = smul.addr %s250, 12
        %s252 = scalar_lea.vmem [#allocation7], %s251
        // Predicated region
        $region45: #{tpu_custom_call.1} parent=39 // pred_check
          %p253 = pneg %p78
        $region46: #{tpu_custom_call.1} parent=39 // pred_check_branch
          %255 = sbr.rel (%p253) target = $region48
        $region47: #{tpu_custom_call.1} parent=39 // pred_region
          %256 = dma.done %s249, 192
        $region48: #{tpu_custom_call.1} parent=39 // pred_fallthru
          _
        // Predicated region
        $region49: #{tpu_custom_call.1} parent=39 // pred_check
          %p257 = pneg %p99
        $region50: #{tpu_custom_call.1} parent=39 // pred_check_branch
          %259 = sbr.rel (%p257) target = $region52
        $region51: #{tpu_custom_call.1} parent=39 // pred_region
          %260 = dma.done [#allocation9], 512
        $region52: #{tpu_custom_call.1} parent=39 // pred_fallthru
          _
        %261 = sfence
        %p262 = pneg %p52
        %p263 = pneg %p49
        %s264 = sand.u32 %s65, 1
        %s265 = scalar_lea.sflag [#allocation4], %s264
        %s266 = sand.u32 %s65, 1
        %s267 = smul.addr %s266, 12
        %s268 = scalar_lea.vmem [#allocation7], %s267
        %p269 = pneg %p78
        %p270 = pneg %p75
        %p271 = pneg %p99
        %p272 = pneg %p96
        %p273 = pneg %p120
        %p274 = pneg %p117
        %p275 = pneg %p141
        %p276 = pneg %p138
        %p277 = pneg %p169
        %p278 = pneg %p166
        %s279 = sand.u32 %s156, 1
        %s280 = scalar_lea.sflag [#allocation5], %s279
        %s281 = sand.u32 %s156, 1
        %s282 = smul.addr %s281, 16
        %s283 = scalar_lea.vmem [#allocation10], %s282
        %p284 = scmp.eq.s32.totalorder %s29, 0
        // Predicated region
        $region53: #{tpu_custom_call.1} parent=39 // pred_check
          %p285 = pneg %p284
        $region54: #{tpu_custom_call.1} parent=39 // pred_check_branch
          %287 = sbr.rel (%p285) target = $region56
        $region55: #{tpu_custom_call.1} parent=39 // pred_region
          %v288 = vld [vmem:[%s252] sm:$0xff]
          %v289 = vld [vmem:[#allocation8] ss:$8 sm:$0x3]
          %v291 = vlaneseq
          %v292 = vshrl.u32 %v291, 7
          %v293 = vsub.s32 0, %v292
          %v294 = vrot.slane %v289, %v293
          %v295 = vlaneseq
          %v296 = vshrl.u32 %v295, 7
          %v297 = vsub.s32 1, %v296
          %v298 = vrot.slane %v289, %v297
          %v299 = vcombine.low %v294, %v298
          %v301 = vmul.f32 %v288, %v299
          %v302 = vld [vmem:[%s252 + $0x8] sm:$0xf]
          %s303 = scalar_lea.vmem [#allocation8], 1
          %v304 = vld [vmem:[%s303] ss:$8 sm:$0x3]
          %v306 = vlaneseq
          %v307 = vshrl.u32 %v306, 7
          %v308 = vsub.s32 0, %v307
          %v309 = vrot.slane %v304, %v308
          %v310 = vlaneseq
          %v311 = vshrl.u32 %v310, 7
          %v312 = vsub.s32 1, %v311
          %v313 = vrot.slane %v304, %v312
          %v314 = vcombine.low %v309, %v313
          %315 = vrot.lane.b32.xlu0 %v314, 1
          %v316 = vpop.permute.xlu0 %315
          %v317 = vrot.slane %v316, 4
          %vm318 = vcmask 7168
          %v319 = vsel %vm318, %v317, %v316
          %v322 = vmul.f32 %v288, %v319
          %v323 = vmul.f32 %v302, %v317
          %s324 = scalar_lea.vmem [#allocation8], 2
          %v325 = vld [vmem:[%s324] ss:$8 sm:$0x3]
          %v327 = vlaneseq
          %v328 = vshrl.u32 %v327, 7
          %v329 = vsub.s32 0, %v328
          %v330 = vrot.slane %v325, %v329
          %v331 = vlaneseq
          %v332 = vshrl.u32 %v331, 7
          %v333 = vsub.s32 1, %v332
          %v334 = vrot.slane %v325, %v333
          %v335 = vcombine.low %v330, %v334
          %336 = vrot.lane.b32.xlu0 %v335, 2
          %v337 = vpop.permute.xlu0 %336
          %v338 = vrot.slane %v337, 4
          %vm339 = vcmask 15360
          %v340 = vsel %vm339, %v338, %v337
          %v343 = vmul.f32 %v288, %v340
          %v344 = vmul.f32 %v302, %v338
          %s345 = scalar_lea.vmem [#allocation8], 3
          %v346 = vld [vmem:[%s345] ss:$8 sm:$0x3]
          %v348 = vlaneseq
          %v349 = vshrl.u32 %v348, 7
          %v350 = vsub.s32 0, %v349
          %v351 = vrot.slane %v346, %v350
          %v352 = vlaneseq
          %v353 = vshrl.u32 %v352, 7
          %v354 = vsub.s32 1, %v353
          %v355 = vrot.slane %v346, %v354
          %v356 = vcombine.low %v351, %v355
          %357 = vrot.lane.b32.xlu0 %v356, 16
          %v358 = vpop.permute.xlu0 %357
          %v359 = vrot.slane %v358, 4
          %vm360 = vcmask 130048
          %v361 = vsel %vm360, %v359, %v358
          %v364 = vmul.f32 %v288, %v361
          %v365 = vmul.f32 %v302, %v359
          %s366 = scalar_lea.vmem [#allocation8], 5
          %v367 = vld [vmem:[%s366] ss:$8 sm:$0x3]
          %v369 = vlaneseq
          %v370 = vshrl.u32 %v369, 7
          %v371 = vsub.s32 0, %v370
          %v372 = vrot.slane %v367, %v371
          %v373 = vlaneseq
          %v374 = vshrl.u32 %v373, 7
          %v375 = vsub.s32 1, %v374
          %v376 = vrot.slane %v367, %v375
          %v377 = vcombine.low %v372, %v376
          %378 = vrot.lane.b32.xlu0 %v377, 18
          %v379 = vpop.permute.xlu0 %378
          %v380 = vrot.slane %v379, 4
          %vm381 = vcmask 146432
          %v382 = vsel %vm381, %v380, %v379
          %v385 = vmul.f32 %v288, %v382
          %v386 = vmul.f32 %v302, %v380
          %s387 = scalar_lea.vmem [#allocation8], 6
          %v388 = vld [vmem:[%s387] ss:$8 sm:$0x3]
          %v390 = vlaneseq
          %v391 = vshrl.u32 %v390, 7
          %v392 = vsub.s32 0, %v391
          %v393 = vrot.slane %v388, %v392
          %v394 = vlaneseq
          %v395 = vshrl.u32 %v394, 7
          %v396 = vsub.s32 1, %v395
          %v397 = vrot.slane %v388, %v396
          %v398 = vcombine.low %v393, %v397
          %399 = vrot.lane.b32.xlu0 %v398, 32
          %v400 = vpop.permute.xlu0 %399
          %v401 = vrot.slane %v400, 4
          %vm402 = vcmask 261120
          %v403 = vsel %vm402, %v401, %v400
          %v406 = vmul.f32 %v288, %v403
          %v407 = vmul.f32 %v302, %v401
          %s408 = scalar_lea.vmem [#allocation8], 7
          %v409 = vld [vmem:[%s408] ss:$8 sm:$0x3]
          %v411 = vlaneseq
          %v412 = vshrl.u32 %v411, 7
          %v413 = vsub.s32 0, %v412
          %v414 = vrot.slane %v409, %v413
          %v415 = vlaneseq
          %v416 = vshrl.u32 %v415, 7
          %v417 = vsub.s32 1, %v416
          %v418 = vrot.slane %v409, %v417
          %v419 = vcombine.low %v414, %v418
          %420 = vrot.lane.b32.xlu0 %v419, 33
          %v421 = vpop.permute.xlu0 %420
          %v422 = vrot.slane %v421, 4
          %vm423 = vcmask 269312
          %v424 = vsel %vm423, %v422, %v421
          %v427 = vmul.f32 %v288, %v424
          %v428 = vmul.f32 %v302, %v422
          %s429 = scalar_lea.vmem [#allocation8], 16
          %v430 = vld [vmem:[%s429] ss:$8 sm:$0x3]
          %v432 = vlaneseq
          %v433 = vshrl.u32 %v432, 7
          %v434 = vsub.s32 0, %v433
          %v435 = vrot.slane %v430, %v434
          %v436 = vlaneseq
          %v437 = vshrl.u32 %v436, 7
          %v438 = vsub.s32 1, %v437
          %v439 = vrot.slane %v430, %v438
          %v440 = vcombine.low %v435, %v439
          %441 = vrot.lane.b32.xlu0 %v440, 34
          %v442 = vpop.permute.xlu0 %441
          %v443 = vrot.slane %v442, 4
          %vm444 = vcmask 277504
          %v445 = vsel %vm444, %v443, %v442
          %v448 = vmul.f32 %v288, %v445
          %v449 = vmul.f32 %v302, %v443
          %v451 = vcombine.high %v301, %v301
          %v455 = vcombine.low %v322, %v322
          %v456 = vcombine.low %v323, %v323
          %457 = vrot.lane.b32.xlu0 %v455, 127
          %v458 = vpop.permute.xlu0 %457
          %459 = vrot.lane.b32.xlu0 %v322, 127
          %v460 = vpop.permute.xlu0 %459
          %461 = vrot.lane.b32.xlu0 %v456, 127
          %v462 = vpop.permute.xlu0 %461
          %vm463 = vcmask 1039360
          %v464 = vsel %vm463, %v458, %v460
          %v465 = vsel %vm463, %v460, %v462
          %v470 = vcombine.high %v343, %v343
          %471 = vrot.lane.b32.xlu0 %v343, 126
          %v472 = vpop.permute.xlu0 %471
          %473 = vrot.lane.b32.xlu0 %v470, 126
          %v474 = vpop.permute.xlu0 %473
          %475 = vrot.lane.b32.xlu0 %v344, 126
          %v476 = vpop.permute.xlu0 %475
          %vm477 = vcmask 1031168
          %v478 = vsel %vm477, %v472, %v474
          %v479 = vsel %vm477, %v474, %v476
          %v484 = vcombine.low %v364, %v364
          %v485 = vcombine.low %v365, %v365
          %486 = vrot.lane.b32.xlu0 %v484, 112
          %v487 = vpop.permute.xlu0 %486
          %488 = vrot.lane.b32.xlu0 %v364, 112
          %v489 = vpop.permute.xlu0 %488
          %490 = vrot.lane.b32.xlu0 %v485, 112
          %v491 = vpop.permute.xlu0 %490
          %vm492 = vcmask 916480
          %v493 = vsel %vm492, %v487, %v489
          %v494 = vsel %vm492, %v489, %v491
          %v499 = vcombine.high %v288, %v288
          %500 = vrot.lane.b32.xlu0 %v288, 111
          %v501 = vpop.permute.xlu0 %500
          %502 = vrot.lane.b32.xlu0 %v499, 111
          %v503 = vpop.permute.xlu0 %502
          %504 = vrot.lane.b32.xlu0 %v302, 111
          %v505 = vpop.permute.xlu0 %504
          %vm506 = vcmask 908288
          %v507 = vsel %vm506, %v501, %v503
          %v508 = vsel %vm506, %v503, %v505
          %v513 = vcombine.low %v385, %v385
          %v514 = vcombine.low %v386, %v386
          %515 = vrot.lane.b32.xlu0 %v513, 110
          %v516 = vpop.permute.xlu0 %515
          %517 = vrot.lane.b32.xlu0 %v385, 110
          %v518 = vpop.permute.xlu0 %517
          %519 = vrot.lane.b32.xlu0 %v514, 110
          %v520 = vpop.permute.xlu0 %519
          %vm521 = vcmask 900096
          %v522 = vsel %vm521, %v516, %v518
          %v523 = vsel %vm521, %v518, %v520
          %v528 = vcombine.high %v406, %v406
          %529 = vrot.lane.b32.xlu0 %v406, 96
          %v530 = vpop.permute.xlu0 %529
          %531 = vrot.lane.b32.xlu0 %v528, 96
          %v532 = vpop.permute.xlu0 %531
          %533 = vrot.lane.b32.xlu0 %v407, 96
          %v534 = vpop.permute.xlu0 %533
          %vm535 = vcmask 785408
          %v536 = vsel %vm535, %v530, %v532
          %v537 = vsel %vm535, %v532, %v534
          %v542 = vcombine.low %v427, %v427
          %v543 = vcombine.low %v428, %v428
          %544 = vrot.lane.b32.xlu0 %v542, 95
          %v545 = vpop.permute.xlu0 %544
          %546 = vrot.lane.b32.xlu0 %v427, 95
          %v547 = vpop.permute.xlu0 %546
          %548 = vrot.lane.b32.xlu0 %v543, 95
          %v549 = vpop.permute.xlu0 %548
          %vm550 = vcmask 777216
          %v551 = vsel %vm550, %v545, %v547
          %v552 = vsel %vm550, %v547, %v549
          %v557 = vcombine.high %v448, %v448
          %558 = vrot.lane.b32.xlu0 %v448, 94
          %v559 = vpop.permute.xlu0 %558
          %560 = vrot.lane.b32.xlu0 %v557, 94
          %v561 = vpop.permute.xlu0 %560
          %562 = vrot.lane.b32.xlu0 %v449, 94
          %v563 = vpop.permute.xlu0 %562
          %vm564 = vcmask 769024
          %v565 = vsel %vm564, %v559, %v561
          %v566 = vsel %vm564, %v561, %v563
          %vm569 = vcmask 1043456
          %v570 = vsel %vm569, %v301, %v464
          %v571 = vsel %vm569, %v451, %v465
          %v572 = vsel %vm569, %v478, %v493
          %v573 = vsel %vm569, %v479, %v494
          %v574 = vsel %vm569, %v507, %v522
          %v575 = vsel %vm569, %v508, %v523
          %v576 = vsel %vm569, %v536, %v551
          %v577 = vsel %vm569, %v537, %v552
          %578 = vst [vmem:[#allocation2] sm:$0xff] %v570
          %579 = vst [vmem:[#allocation2 + $0x8] sm:$0xff] %v571
          %580 = vst [vmem:[#allocation2 + $0x10] sm:$0xff] %v572
          %581 = vst [vmem:[#allocation2 + $0x18] sm:$0xff] %v573
          %582 = vst [vmem:[#allocation2 + $0x20] sm:$0xff] %v574
          %583 = vst [vmem:[#allocation2 + $0x28] sm:$0xff] %v575
          %584 = vst [vmem:[#allocation2 + $0x30] sm:$0xff] %v576
          %585 = vst [vmem:[#allocation2 + $0x38] sm:$0xff] %v577
          %586 = vst [vmem:[#allocation2 + $0x40] sm:$0xf] %v565
          %587 = vst [vmem:[#allocation2 + $0x48] sm:$0xf] %v566
        $region56: #{tpu_custom_call.1} parent=39 // pred_fallthru
          _
        %s588 = smul.u32 %s29, 8
        %s589 = scalar_lea.vmem %s3, %s588
        %v590 = vld [vmem:[%s589] sm:$0xff]
        %s591 = scalar_lea.vmem %s4, %s588
        %v592 = vld [vmem:[%s591] sm:$0xff]
        %v593 = vld [vmem:[#allocation2] sm:$0xff]
        %v594 = vld [vmem:[#allocation2 + $0x8] sm:$0xff]
        %v595 = vld [vmem:[#allocation2 + $0x10] sm:$0xff]
        %v596 = vld [vmem:[#allocation2 + $0x18] sm:$0xff]
        %v597 = vld [vmem:[#allocation2 + $0x20] sm:$0xff]
        %v598 = vld [vmem:[#allocation2 + $0x28] sm:$0xff]
        %v599 = vld [vmem:[#allocation2 + $0x30] sm:$0xff]
        %v600 = vld [vmem:[#allocation2 + $0x38] sm:$0xff]
        %v601 = vld [vmem:[#allocation2 + $0x40] sm:$0xf]
        %v602 = vld [vmem:[#allocation2 + $0x48] sm:$0xf]
        %s603 = sld [smem:[#allocation3 + %s28]]
        %605 = vset.pattern.permute.xlu0 0
        %606 = vperm.xlu0 %605, %v592
        %v607 = vpop.permute.xlu0 %606
        %vm609 = vcmask 293888
        %v611 = vsel %vm609, %v590, 0
        %vm613 = vcmask 1043456
        %v615 = vsel %vm613, %v601, 0
        %v618 = vsel %vm613, %v602, 0
        %620 = vmatprep.subr.mxu0 0.0
        %621 = vmatpush1.msra.mxu0 0.0
        %622 = vmatprep.subr.mxu0 0.0
        %623 = vmatpush1.msra.mxu0 0.0
        %624 = vmatprep.subr.mxu0 0.0
        %625 = vmatpush1.msra.mxu0 0.0
        %626 = vmatprep.subr.mxu0 0.0
        %627 = vmatpush1.msra.mxu0 0.0
        %628 = vmatprep.subr.mxu0 0.0
        %629 = vmatpush1.msra.mxu0 0.0
        %630 = vmatprep.subr.mxu0 0.0
        %631 = vmatpush1.msra.mxu0 0.0
        %632 = vmatprep.subr.mxu0 0.0
        %633 = vmatpush1.msra.mxu0 0.0
        %634 = vmatprep.subr.mxu0 0.0
        %635 = vmatpush1.msra.mxu0 0.0
        %636 = vmatprep.subr.mxu0 0.0
        %637 = vmatpush1.msra.mxu0 0.0
        %638 = vmatprep.subr.mxu0 0.0
        %639 = vmatpush1.msra.mxu0 0.0
        %640 = vmatprep.subr.mxu0 0.0
        %641 = vmatpush1.msra.mxu0 0.0
        %642 = vmatprep.subr.mxu0 %v618
        %643 = vmatpush1.msra.mxu0 %v615
        %644 = vmatprep.subr.mxu0 %v600
        %645 = vmatpush1.msra.mxu0 %v599
        %646 = vmatprep.subr.mxu0 %v598
        %647 = vmatpush1.msra.mxu0 %v597
        %648 = vmatprep.subr.mxu0 %v596
        %649 = vmatpush1.msra.mxu0 %v595
        %650 = vmatprep.subr.mxu0 %v594
        %651 = vmatpush1.msra.mxu0 %v593
        %652 = vmatprep.subr.mxu0 0.0
        %653 = vmatpush2.msra.mxu0 0.0
        %654 = vmatprep.subr.mxu0 0.0
        %655 = vmatpush2.msra.mxu0 0.0
        %656 = vmatprep.subr.mxu0 0.0
        %657 = vmatpush2.msra.mxu0 0.0
        %658 = vmatprep.subr.mxu0 0.0
        %659 = vmatpush2.msra.mxu0 0.0
        %660 = vmatprep.subr.mxu0 0.0
        %661 = vmatpush2.msra.mxu0 0.0
        %662 = vmatprep.subr.mxu0 0.0
        %663 = vmatpush2.msra.mxu0 0.0
        %664 = vmatprep.subr.mxu0 0.0
        %665 = vmatpush2.msra.mxu0 0.0
        %666 = vmatprep.subr.mxu0 0.0
        %667 = vmatpush2.msra.mxu0 0.0
        %668 = vmatprep.subr.mxu0 0.0
        %669 = vmatpush2.msra.mxu0 0.0
        %670 = vmatprep.subr.mxu0 0.0
        %671 = vmatpush2.msra.mxu0 0.0
        %672 = vmatprep.subr.mxu0 0.0
        %673 = vmatpush2.msra.mxu0 0.0
        %674 = vmatprep.subr.mxu0 0.0
        %675 = vmatpush2.msra.mxu0 0.0
        %676 = vmatprep.subr.mxu0 0.0
        %677 = vmatpush2.msra.mxu0 0.0
        %678 = vmatprep.subr.mxu0 0.0
        %679 = vmatpush2.msra.mxu0 0.0
        %680 = vmatprep.subr.mxu0 0.0
        %681 = vmatpush2.msra.mxu0 0.0
        %682 = vmatprep.subr.mxu0 0.0
        %683 = vmatpush2.msra.mxu0 0.0
        %684 = vmatprep.mubr.f32.mxu0 0.0
        %685 = vmatmul.mubr.f32.gmra.mxu0 %v611
        %v686 = vpop.f32.mrf.mxu0
        %v687 = vadd.f32 %v607, %v686
        %v688 = vpop.f32.mrf.mxu0
        %v689 = vadd.f32 %v607, %v688
        %690 = vdwg.mxu0
        %v691 = vstv %s603
        %v692 = vmul.f32 %v687, %v691
        %v693 = vmul.f32 %v689, %v691
        %694 = vst [vmem:[%s283] sm:$0xff] %v692
        %695 = vst [vmem:[%s283 + $0x8] sm:$0xff] %v693
        %s696 = sand.u32 %s156, 1
        %s697 = scalar_lea.sflag [#allocation5], %s696
        %s698 = sand.u32 %s156, 1
        %s699 = smul.addr %s698, 16
        %s700 = scalar_lea.vmem [#allocation10], %s699
        // Predicated region
        $region57: #{tpu_custom_call.1} parent=39 // pred_check
          %p701 = pneg %p166
        $region58: #{tpu_custom_call.1} parent=39 // pred_check_branch
          %703 = sbr.rel (%p701) target = $region60
        $region59: #{tpu_custom_call.1} parent=39 // pred_region
          %s705 = ssub.s32 256, 256
          %706 = vsyncadd %s697, %s705
          %s707 = smul.addr %s29, 2
          %s708 = smul.addr %s28, 2
          %s709 = sadd.s32 %s707, %s708
          %s710 = smul.addr %s709, 128
          %s711 = scalar_lea.hbm %s5, %s710
          %s713 = sshll.u32 %s700, 4
          %s714 = int_to_ptr.vmem [resolvable:$true] %s713
          %716 = dma.vmem_to_hbm [thread:$0]  %s714, 256, %s711, %s697
        $region60: #{tpu_custom_call.1} parent=39 // pred_fallthru
          _
      $region40: #{tpu_custom_call.1} parent=5 // pred_fallthru
        _
      %p717 = scmp.le.s32.totalorder 2, %s19
      // Predicated region
      $region61: #{tpu_custom_call.1} parent=5 // pred_check
        %p718 = pneg %p717
      $region62: #{tpu_custom_call.1} parent=5 // pred_check_branch
        %720 = sbr.rel (%p718) target = $region64
      $region63: #{tpu_custom_call.1} parent=5 // pred_region
        %s721 = ssub.s32 %s19, 2
        // Predicated region
        $region65: #{tpu_custom_call.1} parent=63 // pred_check
          %p722 = pneg %p172
        $region66: #{tpu_custom_call.1} parent=63 // pred_check_branch
          %724 = sbr.rel (%p722) target = $region68
        $region67: #{tpu_custom_call.1} parent=63 // pred_region
          %s725 = sand.u32 %s157, 1
          %s726 = scalar_lea.sflag [#allocation5], %s725
          %s727 = sand.u32 %s157, 1
          %s728 = smul.addr %s727, 16
          %s729 = scalar_lea.vmem [#allocation10], %s728
          %730 = dma.done %s726, 256
        $region68: #{tpu_custom_call.1} parent=63 // pred_fallthru
          _
      $region64: #{tpu_custom_call.1} parent=5 // pred_fallthru
        _
    $region6: #{tpu_custom_call.1} parent=1 // loop_footer
      %s23 = sadd.s32 1, %s19
    $region7: #{tpu_custom_call.1} parent=1 // loop_footer_branch
      %18 = sbr.rel target = $region3
    $region8: #{tpu_custom_call.1} parent=1 // loop_exit
      _
    %731 = vsyncpa [#allocation4], 1
    %s732 = scalar_lea.sflag [#allocation4], 1
    %733 = vsyncpa %s732, 1
    %734 = vsyncpa [#allocation9], 1
    %735 = vsyncpa [#allocation5], 1
    %s736 = scalar_lea.sflag [#allocation5], 1
    %737 = vsyncpa %s736, 1
    %738 = vsyncpa [#allocation6], 1
    %s739 = scalar_lea.sflag [#allocation6], 1
    %740 = vsyncpa %s739, 1

</llo_original>
